<compile_context>
chip_gen: v6e
topology: v6e:2x2x1
jax: 0.10.0
libtpu: 0.0.40
codegen_flags: <defaults>
</compile_context>

<pallas_src>
import functools

import jax
import jax.numpy as jnp
import numpy as np
from jax import lax
from jax.experimental import pallas as pl
from jax.experimental.pallas import tpu as pltpu


# ---------------------------------------------------------------------------
# criterion = BCEWithLogitsLoss(reduction='none'), numerically stable form:
#   loss = max(x, 0) - x*y + log(1 + exp(-|x|))
# ---------------------------------------------------------------------------
def _bce_with_logits(x, y):
    return jnp.maximum(x, 0.0) - x * y + jnp.log1p(jnp.exp(-jnp.abs(x)))


def _round_up(x, m):
    return ((x + m - 1) // m) * m


# ---------------------------------------------------------------------------
# Fused kernel: per-sample mean BCE loss for BOTH logit tensors in one pass.
# Grid = (B tiles [parallel], C tiles [arbitrary reduction]).
# Inputs may be bf16/f32; math is done in f32 in-register.
# ---------------------------------------------------------------------------
def _fused_row_loss_kernel(l1_ref, l2_ref, y_ref, o1_ref, o2_ref,
                           acc1_ref, acc2_ref, *, inv_c, tile_c, c_total,
                           mask_c):
    c = pl.program_id(1)

    @pl.when(c == 0)
    def _():
        acc1_ref[...] = jnp.zeros_like(acc1_ref)
        acc2_ref[...] = jnp.zeros_like(acc2_ref)

    y = y_ref[...].astype(jnp.float32)
    x1 = l1_ref[...].astype(jnp.float32)
    x2 = l2_ref[...].astype(jnp.float32)
    b1 = _bce_with_logits(x1, y)
    b2 = _bce_with_logits(x2, y)

    if mask_c:  # static: only emitted when the C axis is split raggedly
        col = lax.broadcasted_iota(jnp.int32, b1.shape, 1) + c * tile_c
        valid = col < c_total
        b1 = jnp.where(valid, b1, 0.0)
        b2 = jnp.where(valid, b2, 0.0)

    acc1_ref[...] += jnp.sum(b1, axis=1, keepdims=True)
    acc2_ref[...] += jnp.sum(b2, axis=1, keepdims=True)

    @pl.when(c == pl.num_programs(1) - 1)
    def _():
        o1_ref[...] = acc1_ref[...] * inv_c
        o2_ref[...] = acc2_ref[...] * inv_c


def fused_per_sample_loss(logits_1, logits_2, labels):
    """Returns (loss_1, loss_2), each (B,) f32 per-sample mean BCE losses."""
    B, C = logits_1.shape

    itembytes = (logits_1.dtype.itemsize + logits_2.dtype.itemsize
                 + labels.dtype.itemsize)
    min_item = min(logits_1.dtype.itemsize, logits_2.dtype.itemsize,
                   labels.dtype.itemsize)
    # Sublane multiple for the B tile (f32 -> 8, bf16 -> 16, int8/fp8 -> 32).
    sub = 8 if min_item >= 4 else (16 if min_item == 2 else 32)

    lane = 128
    # Double-buffered input VMEM budget: safe on v7x (64 MiB physical) and
    # well under v5e/v6e's 128 MiB.
    input_budget = 24 << 20

    # --- C tiling: keep the full row width while it still permits a >=256-row
    #     B tile; otherwise tile C (reduction axis) to bound VMEM.
    c_pad = _round_up(C, lane)
    if C <= lane or c_pad * itembytes * 2 * 256 <= input_budget:
        tile_c = C
    else:
        tile_c = max(lane, (input_budget // (256 * itembytes * 2)) // lane * lane)
        tile_c = min(tile_c, C)
    nc = pl.cdiv(C, tile_c)
    mask_c = (nc * tile_c) != C  # ragged C tail -> mask padded columns

    # --- B tiling from the lane-padded, dtype-aware footprint.
    row_bytes = _round_up(tile_c, lane) * itembytes * 2  # double-buffered
    tile_b = (input_budget // row_bytes) // sub * sub
    tile_b = max(sub, min(2048, tile_b))
    # Keep >=2 steps on the parallel B axis when B allows it (megacore),
    # and never exceed the (sublane-rounded) array extent.
    tile_b = min(tile_b, max(sub, _round_up(pl.cdiv(B, 2), sub)))
    tile_b = min(tile_b, _round_up(B, sub))
    nb = pl.cdiv(B, tile_b)

    kernel = functools.partial(
        _fused_row_loss_kernel,
        inv_c=1.0 / C,          # plain Python float -> static, not a captured const
        tile_c=tile_c,
        c_total=C,
        mask_c=mask_c,
    )

    in_spec = pl.BlockSpec((tile_b, tile_c), lambda i, c: (i, c))
    out_spec = pl.BlockSpec((tile_b, 1), lambda i, c: (i, 0))

    # TODO(synk): feeding bf16 logits/labels from the call site halves HBM
    # traffic (the kernel already upcasts in-register); kept f32 here to match
    # the module's precision.
    o1, o2 = pl.pallas_call(
        kernel,
        out_shape=(jax.ShapeDtypeStruct((B, 1), jnp.float32),
                   jax.ShapeDtypeStruct((B, 1), jnp.float32)),
        grid=(nb, nc),
        in_specs=[in_spec, in_spec, in_spec],
        out_specs=(out_spec, out_spec),
        scratch_shapes=[pltpu.VMEM((tile_b, 1), jnp.float32),
                        pltpu.VMEM((tile_b, 1), jnp.float32)],
        compiler_params=pltpu.CompilerParams(
            dimension_semantics=("parallel", "arbitrary"),
            vmem_limit_bytes=40 << 20),
    )(logits_1, logits_2, labels)

    return o1[:, 0], o2[:, 0]


# ---------------------------------------------------------------------------
# CoteachingLoss forward (JAX glue around the fused Pallas kernel)
# ---------------------------------------------------------------------------
class CoteachingLoss:
    def __init__(self, forget_rate):
        self.forget_rate = float(forget_rate)

    def __call__(self, logits, labels):
        logits_1 = logits[0]
        logits_2 = logits[-1]

        # Single fused pass over HBM for both per-sample loss vectors.
        loss_1, loss_2 = fused_per_sample_loss(logits_1, logits_2, labels)

        # TODO(synk): argsort has no clean Pallas TPU equivalent; done in JAX.
        ind_1_sorted = jnp.argsort(loss_1)
        ind_2_sorted = jnp.argsort(loss_2)

        remember_rate = 1.0 - self.forget_rate
        num_remember = int(remember_rate * loss_1.shape[0])  # static
        num_remember = max(1, num_remember)  # guard forget_rate == 1.0

        ind_1_update = ind_1_sorted[:num_remember]
        ind_2_update = ind_2_sorted[:num_remember]

        # For an element-wise criterion with equal row width C, the mean over
        # the selected rows' elements equals the mean of those rows' per-row
        # means, so no second pass over logits/labels is needed.
        loss_1_update = jnp.mean(loss_1[ind_2_update])
        loss_2_update = jnp.mean(loss_2[ind_1_update])
        return [loss_1_update, loss_2_update]


# ---------------------------------------------------------------------------
# Pure-JAX reference (same semantics as the PyTorch module)
# ---------------------------------------------------------------------------
def _reference(logits, labels, forget_rate):
    l1, l2 = logits[0], logits[-1]
    per1 = _bce_with_logits(l1, labels).mean(axis=1)
    per2 = _bce_with_logits(l2, labels).mean(axis=1)
    i1 = jnp.argsort(per1)
    i2 = jnp.argsort(per2)
    n = max(1, int((1.0 - forget_rate) * per1.shape[0]))
    u1 = _bce_with_logits(l1[i2[:n]], labels[i2[:n]]).mean()
    u2 = _bce_with_logits(l2[i1[:n]], labels[i1[:n]]).mean()
    return [u1, u2]


if __name__ == "__main__":
    B, C = 8, 32
    forget_rate = 0.25

    key = jax.random.PRNGKey(0)
    k1, k2, k3 = jax.random.split(key, 3)
    logits_1 = jax.random.normal(k1, (B, C), dtype=jnp.float32)
    logits_2 = jax.random.normal(k2, (B, C), dtype=jnp.float32)
    labels = (jax.random.uniform(k3, (B, C)) > 0.5).astype(jnp.float32)

    loss_fn = CoteachingLoss(forget_rate)
    out = loss_fn([logits_1, logits_2], labels)
    out = [jax.block_until_ready(o) for o in out]

    ref = _reference([logits_1, logits_2], labels, forget_rate)
    np.testing.assert_allclose(np.asarray(out[0]), np.asarray(ref[0]),
                               rtol=1e-5, atol=1e-5)
    np.testing.assert_allclose(np.asarray(out[1]), np.asarray(ref[1]),
                               rtol=1e-5, atol=1e-5)

    print("KERNEL_OK")
</pallas_src>

<mosaic_0001>
module attributes {stable_mosaic.version = 11 : i64} {
  func.func @_fused_row_loss_kernel(%arg0: i32, %arg1: i32, %arg2: memref<8x32xf32, #tpu.memory_space<vmem>>, %arg3: memref<8x32xf32, #tpu.memory_space<vmem>>, %arg4: memref<8x32xf32, #tpu.memory_space<vmem>>, %arg5: memref<8x1xf32, #tpu.memory_space<vmem>>, %arg6: memref<8x1xf32, #tpu.memory_space<vmem>>, %arg7: memref<8x1xf32, #tpu.memory_space<vmem>>, %arg8: memref<8x1xf32, #tpu.memory_space<vmem>>) attributes {dimension_semantics = [#tpu.dimension_semantics<parallel>, #tpu.dimension_semantics<arbitrary>], iteration_bounds = array<i64: 1, 1>, scalar_prefetch = 0 : i64, scratch_operands = 2 : i64, tpu.core_type = #tpu.core_type<tc>, window_params = [{transform_indices = @transform_0, window_bounds = array<i64: 8, 32>}, {transform_indices = @transform_1, window_bounds = array<i64: 8, 32>}, {transform_indices = @transform_2, window_bounds = array<i64: 8, 32>}, {transform_indices = @transform_3, window_bounds = array<i64: 8, 1>}, {transform_indices = @transform_4, window_bounds = array<i64: 8, 1>}]} {
    %c0_i32 = arith.constant 0 : i32
    %0 = arith.cmpi eq, %arg1, %c0_i32 : i32
    %1 = arith.extui %0 : i1 to i32
    %c0_i32_0 = arith.constant 0 : i32
    %2 = arith.cmpi ne, %1, %c0_i32_0 : i32
    scf.if %2 {
      %cst_21 = arith.constant 0.000000e+00 : f32
      %39 = vector.broadcast %cst_21 : f32 to vector<8x1xf32>
      %c0_22 = arith.constant 0 : index
      %c0_23 = arith.constant 0 : index
      %40 = vector.load %arg7[%c0_22, %c0_23] : memref<8x1xf32, #tpu.memory_space<vmem>>, vector<8x1xf32>
      tpu.vector_store %arg7[%c0_22, %c0_23], %39 {strides = array<i32>} : memref<8x1xf32, #tpu.memory_space<vmem>>, vector<8x1xf32>,
      %cst_24 = arith.constant 0.000000e+00 : f32
      %41 = vector.broadcast %cst_24 : f32 to vector<8x1xf32>
      %c0_25 = arith.constant 0 : index
      %c0_26 = arith.constant 0 : index
      %42 = vector.load %arg8[%c0_25, %c0_26] : memref<8x1xf32, #tpu.memory_space<vmem>>, vector<8x1xf32>
      tpu.vector_store %arg8[%c0_25, %c0_26], %41 {strides = array<i32>} : memref<8x1xf32, #tpu.memory_space<vmem>>, vector<8x1xf32>,
    } else {
    }
    %c0 = arith.constant 0 : index
    %c0_1 = arith.constant 0 : index
    %3 = vector.load %arg4[%c0, %c0_1] : memref<8x32xf32, #tpu.memory_space<vmem>>, vector<8x32xf32>
    %c0_2 = arith.constant 0 : index
    %c0_3 = arith.constant 0 : index
    %4 = vector.load %arg2[%c0_2, %c0_3] : memref<8x32xf32, #tpu.memory_space<vmem>>, vector<8x32xf32>
    %c0_4 = arith.constant 0 : index
    %c0_5 = arith.constant 0 : index
    %5 = vector.load %arg3[%c0_4, %c0_5] : memref<8x32xf32, #tpu.memory_space<vmem>>, vector<8x32xf32>
    %cst = arith.constant 0.000000e+00 : f32
    %6 = vector.broadcast %cst : f32 to vector<8x32xf32>
    %7 = arith.maximumf %4, %6 : vector<8x32xf32>
    %8 = arith.mulf %4, %3 : vector<8x32xf32>
    %9 = arith.subf %7, %8 : vector<8x32xf32>
    %10 = math.absf %4 : vector<8x32xf32>
    %cst_6 = arith.constant 0.000000e+00 : f32
    %11 = vector.broadcast %cst_6 : f32 to vector<8x32xf32>
    %12 = arith.subf %11, %10 : vector<8x32xf32>
    %13 = math.exp %12 : vector<8x32xf32>
    %14 = math.log1p %13 : vector<8x32xf32>
    %15 = arith.addf %9, %14 : vector<8x32xf32>
    %cst_7 = arith.constant 0.000000e+00 : f32
    %16 = vector.broadcast %cst_7 : f32 to vector<8x32xf32>
    %17 = arith.maximumf %5, %16 : vector<8x32xf32>
    %18 = arith.mulf %5, %3 : vector<8x32xf32>
    %19 = arith.subf %17, %18 : vector<8x32xf32>
    %20 = math.absf %5 : vector<8x32xf32>
    %cst_8 = arith.constant 0.000000e+00 : f32
    %21 = vector.broadcast %cst_8 : f32 to vector<8x32xf32>
    %22 = arith.subf %21, %20 : vector<8x32xf32>
    %23 = math.exp %22 : vector<8x32xf32>
    %24 = math.log1p %23 : vector<8x32xf32>
    %25 = arith.addf %19, %24 : vector<8x32xf32>
    %c0_9 = arith.constant 0 : index
    %c0_10 = arith.constant 0 : index
    %26 = vector.load %arg7[%c0_9, %c0_10] : memref<8x1xf32, #tpu.memory_space<vmem>>, vector<8x1xf32>
    %cst_11 = arith.constant dense<0.000000e+00> : vector<8xf32>
    %27 = vector.multi_reduction <add>, %15, %cst_11 [1] : vector<8x32xf32> to vector<8xf32>
    %28 = vector.shape_cast %27 : vector<8xf32> to vector<8x1xf32>
    %29 = arith.addf %26, %28 : vector<8x1xf32>
    %c0_12 = arith.constant 0 : index
    %c0_13 = arith.constant 0 : index
    %30 = vector.load %arg7[%c0_12, %c0_13] : memref<8x1xf32, #tpu.memory_space<vmem>>, vector<8x1xf32>
    tpu.vector_store %arg7[%c0_12, %c0_13], %29 {strides = array<i32>} : memref<8x1xf32, #tpu.memory_space<vmem>>, vector<8x1xf32>,
    %c0_14 = arith.constant 0 : index
    %c0_15 = arith.constant 0 : index
    %31 = vector.load %arg8[%c0_14, %c0_15] : memref<8x1xf32, #tpu.memory_space<vmem>>, vector<8x1xf32>
    %cst_16 = arith.constant dense<0.000000e+00> : vector<8xf32>
    %32 = vector.multi_reduction <add>, %25, %cst_16 [1] : vector<8x32xf32> to vector<8xf32>
    %33 = vector.shape_cast %32 : vector<8xf32> to vector<8x1xf32>
    %34 = arith.addf %31, %33 : vector<8x1xf32>
    %c0_17 = arith.constant 0 : index
    %c0_18 = arith.constant 0 : index
    %35 = vector.load %arg8[%c0_17, %c0_18] : memref<8x1xf32, #tpu.memory_space<vmem>>, vector<8x1xf32>
    tpu.vector_store %arg8[%c0_17, %c0_18], %34 {strides = array<i32>} : memref<8x1xf32, #tpu.memory_space<vmem>>, vector<8x1xf32>,
    %c0_i32_19 = arith.constant 0 : i32
    %36 = arith.cmpi eq, %arg1, %c0_i32_19 : i32
    %37 = arith.extui %36 : i1 to i32
    %c0_i32_20 = arith.constant 0 : i32
    %38 = arith.cmpi ne, %37, %c0_i32_20 : i32
    scf.if %38 {
      %c0_21 = arith.constant 0 : index
      %c0_22 = arith.constant 0 : index
      %39 = vector.load %arg7[%c0_21, %c0_22] : memref<8x1xf32, #tpu.memory_space<vmem>>, vector<8x1xf32>
      %cst_23 = arith.constant 3.125000e-02 : f32
      %40 = vector.broadcast %cst_23 : f32 to vector<8x1xf32>
      %41 = arith.mulf %39, %40 : vector<8x1xf32>
      %c0_24 = arith.constant 0 : index
      %c0_25 = arith.constant 0 : index
      %42 = vector.load %arg5[%c0_24, %c0_25] : memref<8x1xf32, #tpu.memory_space<vmem>>, vector<8x1xf32>
      tpu.vector_store %arg5[%c0_24, %c0_25], %41 {strides = array<i32>} : memref<8x1xf32, #tpu.memory_space<vmem>>, vector<8x1xf32>,
      %c0_26 = arith.constant 0 : index
      %c0_27 = arith.constant 0 : index
      %43 = vector.load %arg8[%c0_26, %c0_27] : memref<8x1xf32, #tpu.memory_space<vmem>>, vector<8x1xf32>
      %cst_28 = arith.constant 3.125000e-02 : f32
      %44 = vector.broadcast %cst_28 : f32 to vector<8x1xf32>
      %45 = arith.mulf %43, %44 : vector<8x1xf32>
      %c0_29 = arith.constant 0 : index
      %c0_30 = arith.constant 0 : index
      %46 = vector.load %arg6[%c0_29, %c0_30] : memref<8x1xf32, #tpu.memory_space<vmem>>, vector<8x1xf32>
      tpu.vector_store %arg6[%c0_29, %c0_30], %45 {strides = array<i32>} : memref<8x1xf32, #tpu.memory_space<vmem>>, vector<8x1xf32>,
    } else {
    }
    return
  }
  func.func @transform_0(%arg0: i32, %arg1: i32) -> (i32, i32) {
    %c0_i32 = arith.constant 0 : i32
    return %arg0, %arg1 : i32, i32
  }
  func.func @transform_1(%arg0: i32, %arg1: i32) -> (i32, i32) {
    %c0_i32 = arith.constant 0 : i32
    return %arg0, %arg1 : i32, i32
  }
  func.func @transform_2(%arg0: i32, %arg1: i32) -> (i32, i32) {
    %c0_i32 = arith.constant 0 : i32
    return %arg0, %arg1 : i32, i32
  }
  func.func @transform_3(%arg0: i32, %arg1: i32) -> (i32, i32) {
    %c0_i32 = arith.constant 0 : i32
    %c0_i32_0 = arith.constant 0 : i32
    return %arg0, %c0_i32 : i32, i32
  }
  func.func @transform_4(%arg0: i32, %arg1: i32) -> (i32, i32) {
    %c0_i32 = arith.constant 0 : i32
    %c0_i32_0 = arith.constant 0 : i32
    return %arg0, %c0_i32 : i32, i32
  }
}

</mosaic_0001>

<llo_original>
// kernel: tpu_custom_call.1
$region0: #{tpu_custom_call.1}
  #allocation0 [shape = 'u32[]', space=smem, size = 0x4, offset = 0x4, fixed_abs, tag = 'smem constant byte address 0x4 - core index']
  #allocation1 [shape = 'u32[144,128]{1,0:T(1,128)}', space=vmem, size = 0x12000, scoped, tag = 'internal scratch']
  #allocation2 [shape = 'f32[8,1]{1,0:T(8,128)}', space=vmem, size = 0x1000, scoped, tag = 'scratch operand']
  #allocation3 [shape = 'f32[8,1]{1,0:T(8,128)}', space=vmem, size = 0x1000, scoped, tag = 'scratch operand']
  %s0 = inlined_call_operand.hbm [shape: f32[8,32], index: 0, kind: input, shape index: {}]
  %s1 = inlined_call_operand.hbm [shape: f32[8,32], index: 1, kind: input, shape index: {}]
  %s2 = inlined_call_operand.hbm [shape: f32[8,32], index: 2, kind: input, shape index: {}]
  %s3 = inlined_call_operand.vmem [shape: f32[8,1], index: 3, kind: output, shape index: {0}]
  %s4 = inlined_call_operand.vmem [shape: f32[8,1], index: 4, kind: output, shape index: {1}]
  %5 = xla_tuple %s3, %s4
  %s6 = sld [smem:[#allocation0]]
  $region50: #{tpu_custom_call.1} parent=0
    _
  %s8 = ssub.s32 1, %s6
  %s9 = scalar_select 0, %s8, %s6
  $region1: #{tpu_custom_call.1} parent=0
    #allocation4 [shape = 'u8[4096]{0}', space=vmem, size = 0x1000, scoped, tag = 'input window, operand 0, single buffered']
    #allocation5 [shape = 's32[1]{0}', space=sflag, size = 0x4, scoped, tag = 'scoped memory for tpu_custom_call.1']
    #allocation6 [shape = 'u8[4096]{0}', space=vmem, size = 0x1000, scoped, tag = 'input window, operand 1, single buffered']
    #allocation7 [shape = 's32[1]{0}', space=sflag, size = 0x4, scoped, tag = 'scoped memory for tpu_custom_call.1']
    #allocation8 [shape = 'u8[4096]{0}', space=vmem, size = 0x1000, scoped, tag = 'input window, operand 2, single buffered']
    %10 = vsyncpa [#allocation5], 0
    %11 = vsyncpa [#allocation7], 0
    // Predicated region
    $region2: #{tpu_custom_call.1} parent=1 // pred_check
      _
    $region3: #{tpu_custom_call.1} parent=1 // pred_check_branch
      %13 = sbr.rel (0) target = $region5
    $region4: #{tpu_custom_call.1} parent=1 // pred_region
      %s15 = ssub.s32 128, 128
      %16 = vsyncadd [#allocation5], %s15
      %s18 = sshll.u32 [#allocation4], 4
      %s19 = int_to_ptr.vmem [resolvable:$true] %s18
      %21 = dma.hbm_to_vmem [thread:$0]  %s0, 128, %s19, [#allocation5]
    $region5: #{tpu_custom_call.1} parent=1 // pred_fallthru
      _
    // Predicated region
    $region6: #{tpu_custom_call.1} parent=1 // pred_check
      _
    $region7: #{tpu_custom_call.1} parent=1 // pred_check_branch
      %23 = sbr.rel (0) target = $region9
    $region8: #{tpu_custom_call.1} parent=1 // pred_region
      %s25 = ssub.s32 128, 128
      %26 = vsyncadd [#allocation7], %s25
      %s28 = sshll.u32 [#allocation6], 4
      %s29 = int_to_ptr.vmem [resolvable:$true] %s28
      %31 = dma.hbm_to_vmem [thread:$0]  %s1, 128, %s29, [#allocation7]
    $region9: #{tpu_custom_call.1} parent=1 // pred_fallthru
      _
    // Predicated region
    $region10: #{tpu_custom_call.1} parent=1 // pred_check
      _
    $region11: #{tpu_custom_call.1} parent=1 // pred_check_branch
      %33 = sbr.rel (0) target = $region13
    $region12: #{tpu_custom_call.1} parent=1 // pred_region
      %s35 = ssub.s32 128, 128
      %36 = vsyncadd [#allocation7], %s35
      %s38 = sshll.u32 [#allocation8], 4
      %s39 = int_to_ptr.vmem [resolvable:$true] %s38
      %41 = dma.hbm_to_vmem [thread:$0]  %s2, 128, %s39, [#allocation7]
    $region13: #{tpu_custom_call.1} parent=1 // pred_fallthru
      _
    // Predicated region
    $region14: #{tpu_custom_call.1} parent=1 // pred_check
      _
    $region15: #{tpu_custom_call.1} parent=1 // pred_check_branch
      %43 = sbr.rel (0) target = $region17
    $region16: #{tpu_custom_call.1} parent=1 // pred_region
      %44 = dma.done [#allocation5], 128
    $region17: #{tpu_custom_call.1} parent=1 // pred_fallthru
      _
    // Predicated region
    $region18: #{tpu_custom_call.1} parent=1 // pred_check
      _
    $region19: #{tpu_custom_call.1} parent=1 // pred_check_branch
      %46 = sbr.rel (0) target = $region21
    $region20: #{tpu_custom_call.1} parent=1 // pred_region
      %47 = dma.done [#allocation7], 128
    $region21: #{tpu_custom_call.1} parent=1 // pred_fallthru
      _
    // Predicated region
    $region22: #{tpu_custom_call.1} parent=1 // pred_check
      _
    $region23: #{tpu_custom_call.1} parent=1 // pred_check_branch
      %49 = sbr.rel (0) target = $region25
    $region24: #{tpu_custom_call.1} parent=1 // pred_region
      %50 = dma.done [#allocation7], 128
    $region25: #{tpu_custom_call.1} parent=1 // pred_fallthru
      _
    %p51 = scmp.eq.s32.totalorder 0, 0
    // Predicated region
    $region26: #{tpu_custom_call.1} parent=1 // pred_check
      %p52 = pneg %p51
    $region27: #{tpu_custom_call.1} parent=1 // pred_check_branch
      %54 = sbr.rel (%p52) target = $region29
    $region28: #{tpu_custom_call.1} parent=1 // pred_region
      %vm55 = vcmask 7168
      %56 = vst.msk [vmem:[#allocation2] sm:$0xff] %vm55, 0.0
      %57 = vst.msk [vmem:[#allocation3] sm:$0xff] %vm55, 0.0
    $region29: #{tpu_custom_call.1} parent=1 // pred_fallthru
      _
    %v58 = vld [vmem:[#allocation8] sm:$0xff]
    %v59 = vld [vmem:[#allocation4] sm:$0xff]
    %v60 = vld [vmem:[#allocation6] sm:$0xff]
    %v61 = vmax.f32 %v59, 0.0
    %v62 = vmul.f32 %v59, %v58
    %v63 = vsub.f32 %v61, %v62
    %v64 = vand.u32 2147483647, %v59
    %v65 = vsub.f32 0.0, %v64
    %v66 = vmul.f32 %v65, 1.442695
    %v67 = vpow.pop %v66
    %v68 = vadd.f32 %v67, 1.0
    %v69 = vlog2.pop %v68
    %v70 = vmul.f32 %v69, 0.6931472
    %v71 = vmul.f32 -0.5, %v67
    %v72 = vadd.f32 %v71, 1.0
    %v73 = vmul.f32 %v72, %v67
    %v74 = vand.u32 2147483647, %v67
    %vm75 = vcmp.lt.f32.partialorder %v74, 0.0004427343
    %v76 = vsel %vm75, %v73, %v70
    %v77 = vadd.f32 %v63, %v76
    %v78 = vmax.f32 %v60, 0.0
    %v79 = vmul.f32 %v60, %v58
    %v80 = vsub.f32 %v78, %v79
    %v81 = vand.u32 2147483647, %v60
    %v82 = vsub.f32 0.0, %v81
    %v83 = vmul.f32 %v82, 1.442695
    %v84 = vpow.pop %v83
    %v85 = vadd.f32 %v84, 1.0
    %v86 = vlog2.pop %v85
    %v87 = vmul.f32 %v86, 0.6931472
    %v88 = vmul.f32 -0.5, %v84
    %v89 = vadd.f32 %v88, 1.0
    %v90 = vmul.f32 %v89, %v84
    %v91 = vand.u32 2147483647, %v84
    %vm92 = vcmp.lt.f32.partialorder %v91, 0.0004427343
    %v93 = vsel %vm92, %v90, %v87
    %v94 = vadd.f32 %v80, %v93
    %v95 = vld [vmem:[#allocation2] sm:$0xff]
    %vm96 = vcmask 261120
    %v97 = vsel %vm96, %v77, 0.0
    %98 = vadd.xlane.f32.xlu0 %v97
    %v99 = vpop.xlane.xlu0 %98
    %v100 = vadd.f32 %v95, %v99
    %vm101 = vcmask 7168
    %102 = vst.msk [vmem:[#allocation2] sm:$0xff] %vm101, %v100
    %v103 = vld [vmem:[#allocation3] sm:$0xff]
    %v104 = vsel %vm96, %v94, 0.0
    %105 = vadd.xlane.f32.xlu0 %v104
    %v106 = vpop.xlane.xlu0 %105
    %v107 = vadd.f32 %v103, %v106
    %108 = vst.msk [vmem:[#allocation3] sm:$0xff] %vm101, %v107
    // Predicated region
    $region30: #{tpu_custom_call.1} parent=1 // pred_check
      %p109 = pneg %p51
    $region31: #{tpu_custom_call.1} parent=1 // pred_check_branch
      %111 = sbr.rel (%p109) target = $region33
    $region32: #{tpu_custom_call.1} parent=1 // pred_region
      %v112 = vld [vmem:[#allocation2] sm:$0xff]
      %v113 = vmul.f32 %v112, 0.03125
      %114 = vst.msk [vmem:[%s3] sm:$0xff] %vm101, %v113
      %v115 = vld [vmem:[#allocation3] sm:$0xff]
      %v116 = vmul.f32 %v115, 0.03125
      %117 = vst.msk [vmem:[%s4] sm:$0xff] %vm101, %v116
    $region33: #{tpu_custom_call.1} parent=1 // pred_fallthru
      _
    // Predicated region
    $region34: #{tpu_custom_call.1} parent=1 // pred_check
      _
    $region35: #{tpu_custom_call.1} parent=1 // pred_check_branch
      %119 = sbr.rel (0) target = $region37
    $region36: #{tpu_custom_call.1} parent=1 // pred_region
      _
    $region37: #{tpu_custom_call.1} parent=1 // pred_fallthru
      _
    // Predicated region
    $region38: #{tpu_custom_call.1} parent=1 // pred_check
      _
    $region39: #{tpu_custom_call.1} parent=1 // pred_check_branch
      %121 = sbr.rel (0) target = $region41
    $region40: #{tpu_custom_call.1} parent=1 // pred_region
      _
    $region41: #{tpu_custom_call.1} parent=1 // pred_fallthru
      _
    // Predicated region
    $region42: #{tpu_custom_call.1} parent=1 // pred_check
      _
    $region43: #{tpu_custom_call.1} parent=1 // pred_check_branch
      %123 = sbr.rel (0) target = $region45
    $region44: #{tpu_custom_call.1} parent=1 // pred_region
      _
    $region45: #{tpu_custom_call.1} parent=1 // pred_fallthru
      _
    // Predicated region
    $region46: #{tpu_custom_call.1} parent=1 // pred_check
      _
    $region47: #{tpu_custom_call.1} parent=1 // pred_check_branch
      %125 = sbr.rel (0) target = $region49
    $region48: #{tpu_custom_call.1} parent=1 // pred_region
      _
    $region49: #{tpu_custom_call.1} parent=1 // pred_fallthru
      _
    %126 = vsyncpa [#allocation5], 1
    %127 = vsyncpa [#allocation7], 1

</llo_original>
